<compile_context>
chip_gen: v5e
topology: v5e:2x2
jax: 0.10.0
libtpu: 0.0.40
codegen_flags: <defaults>
</compile_context>

<pallas_src>
import jax
import jax.numpy as jnp
from jax.experimental import pallas as pl
from jax.experimental.pallas import tpu as pltpu


_NEG_F32 = float(jnp.finfo(jnp.float32).min)
_POOL_CHUNK_BYTES = 4 * 1024 * 1024          # cap on the per-chunk f32 pooling temp


# ---------------------------------------------------------------------------
# Kernels
# ---------------------------------------------------------------------------
def _make_fused_kernel(hw, reduced):
    """Single-pass kernel: pool (one traversal) + shared MLP + sigmoid + scale."""
    inv_hw = 1.0 / hw
    use_mxu = reduced >= 8                   # tiny MLPs stay on the VPU/XLU

    def kernel(x_ref, w1_ref, w2t_ref, o_ref):
        bt, c, _ = x_ref.shape

        # ---- Pooling: single traversal, chunked along HW so f32 temporaries
        # stay bounded.  max() is exact in the input dtype, so only the sum
        # needs the f32 upcast (one cast per element, not three).
        chunk = max(128, (_POOL_CHUNK_BYTES // (bt * c * 4)) // 128 * 128)
        sum_c = jnp.zeros((bt, c), jnp.float32)
        max_c = jnp.full((bt, c), _NEG_F32, jnp.float32)
        for s in range(0, hw, chunk):                         # static, trace-time
            xc = x_ref[:, :, s:min(s + chunk, hw)]
            sum_c = sum_c + jnp.sum(xc.astype(jnp.float32), axis=2)
            max_c = jnp.maximum(max_c, jnp.max(xc, axis=2).astype(jnp.float32))
        avg_c = sum_c * inv_hw                                # (Bt, C)

        # ---- Fused shared MLP over both pooled vectors at once.
        pooled = jnp.concatenate([avg_c, max_c], axis=0)      # (2*Bt, C) f32
        if use_mxu:
            h = jax.lax.dot_general(pooled, w1_ref[...],
                                    (((1,), (1,)), ((), ())),
                                    preferred_element_type=jnp.float32)  # (2Bt, R)
            h = jnp.maximum(h, 0.0)
            out = jnp.dot(h, w2t_ref[...],
                          preferred_element_type=jnp.float32)            # (2Bt, C)
        else:
            out = jnp.zeros_like(pooled)
            for r in range(reduced):                          # static unroll, R small
                h_r = jnp.sum(pooled * w1_ref[r:r + 1, :], axis=1, keepdims=True)
                h_r = jnp.maximum(h_r, 0.0)                   # (2Bt, 1)
                out = out + h_r * w2t_ref[r:r + 1, :]          # (2Bt, C)
        scale = jax.nn.sigmoid(out[:bt] + out[bt:])           # (Bt, C) f32

        # ---- Apply in the I/O dtype: bf16 multiply stays bf16 (v6e/v7x VPU),
        # f32 stays f32; v5e's compiler upcasts bf16 internally if needed.
        x = x_ref[...]
        o_ref[...] = (x * scale.astype(x.dtype)[:, :, None]).astype(o_ref.dtype)

    return kernel


def _make_pool_mlp_kernel(hw_actual, thw, ragged):
    """Two-pass fallback, pass A: accumulate sum/max over HW tiles, then MLP.

    The HW grid is cdiv-sized; only the final tile can contain out-of-bounds
    lanes, so masking (iota + where) runs on that tile alone (review item).
    """
    inv_hw = 1.0 / hw_actual
    rem = hw_actual % thw                    # valid lanes in the ragged last tile

    def kernel(x_ref, w1_ref, w2_ref, scale_ref, sum_acc, max_acc):
        t = pl.program_id(1)
        is_last = t == pl.num_programs(1) - 1

        @pl.when(t == 0)
        def _():
            sum_acc[...] = jnp.zeros_like(sum_acc)
            max_acc[...] = jnp.full_like(max_acc, _NEG_F32)

        x = x_ref[0].astype(jnp.float32)                      # (C, THW)

        def accumulate(x_sum, x_max):
            sum_acc[...] += jnp.sum(x_sum, axis=1, keepdims=True)
            max_acc[...] = jnp.maximum(max_acc[...],
                                       jnp.max(x_max, axis=1, keepdims=True))

        if ragged:
            @pl.when(is_last)
            def _():
                lane = jax.lax.broadcasted_iota(jnp.int32, x.shape, 1)
                valid = lane < rem
                accumulate(jnp.where(valid, x, 0.0),
                           jnp.where(valid, x, _NEG_F32))

            @pl.when(jnp.logical_not(is_last))
            def _():
                accumulate(x, x)
        else:
            accumulate(x, x)

        @pl.when(is_last)
        def _():
            avg = sum_acc[...] * inv_hw                       # (C, 1)
            pooled = jnp.concatenate([avg, max_acc[...]], axis=1)   # (C, 2)
            h = jnp.maximum(
                jnp.dot(w1_ref[...], pooled,
                        preferred_element_type=jnp.float32), 0.0)   # (R, 2)
            out = jnp.dot(w2_ref[...], h,
                          preferred_element_type=jnp.float32)       # (C, 2)
            scale_ref[0] = jax.nn.sigmoid(out[:, 0:1] + out[:, 1:2])  # (C, 1)

    return kernel


def _apply_scale_kernel(x_ref, scale_ref, o_ref):
    """Two-pass fallback, pass B: broadcast-multiply by the per-channel scale."""
    x = x_ref[0]                                              # (C, THW), I/O dtype
    o_ref[0] = (x * scale_ref[0].astype(x.dtype)).astype(o_ref.dtype)


# ---------------------------------------------------------------------------
# Sizing helpers
# ---------------------------------------------------------------------------
def _vmem_capacity_bytes():
    try:
        return int(pltpu.get_tpu_info().vmem_capacity_bytes)
    except Exception:
        return 64 * 1024 * 1024  # conservative (v7x-sized) fallback


def _pick_bt(batch, per_batch_bytes, block_cap_bytes):
    """Largest batch packing that fits the cap while keeping enough grid steps.

    Prefers >= 4 grid steps (megacore sharding on v7x + DMA/compute overlap),
    then >= 2.  Non-divisor bt is allowed; the wrapper uses a cdiv grid with a
    ragged last batch block (OOB reads are masked by garbage-tolerant math,
    OOB writes are dropped by the pipeline).
    """
    max_bt = max(1, min(batch, block_cap_bytes // max(per_batch_bytes, 1)))
    for min_steps in (4, 2):
        for bt in range(max_bt, 0, -1):
            if pl.cdiv(batch, bt) >= min_steps:
                return bt
    return max_bt


# ---------------------------------------------------------------------------
# Wrapper
# ---------------------------------------------------------------------------
def channel_attention_block(x_nchw, w1, w2, *, force_two_pass=False, hw_tile=None):
    """x_nchw: (B, C, H, W); w1: (C//r, C); w2: (C, C//r) — 1x1 conv weights."""
    B, C, H, W = x_nchw.shape
    R = w1.shape[0]
    assert R >= 1 and w1.shape == (R, C) and w2.shape == (C, R)

    HW = H * W
    x_flat = x_nchw.reshape(B, C, HW)             # no pad: blocks span full HW
    w1 = w1.astype(jnp.float32)
    w2 = w2.astype(jnp.float32)
    w2t = jnp.transpose(w2)                        # (R, C), lane-dense rows

    itemsize = jnp.dtype(x_flat.dtype).itemsize
    vmem_cap = _vmem_capacity_bytes()
    vmem_limit = min(int(0.75 * vmem_cap), 100 * 1024 * 1024)
    # Live VMEM ~ 4x block (in + out, double-buffered) plus per-chunk f32
    # pooling temporaries -> leave headroom; tighter for sub-32-bit I/O.
    denom = 5 if itemsize >= 4 else 6
    block_cap = vmem_limit // denom
    per_batch_bytes = C * HW * itemsize
    weight_bytes = 2 * R * C * 4

    single_pass = (not force_two_pass) and (per_batch_bytes <= block_cap)

    if single_pass:
        bt = _pick_bt(B, per_batch_bytes, block_cap)
        grid_b = pl.cdiv(B, bt)
        cost = pl.CostEstimate(
            flops=3 * B * C * HW + 8 * B * C * R,
            transcendentals=B * C,
            bytes_accessed=2 * B * C * HW * itemsize + weight_bytes)
        out_flat = pl.pallas_call(
            _make_fused_kernel(HW, R),
            out_shape=jax.ShapeDtypeStruct((B, C, HW), x_flat.dtype),
            grid_spec=pltpu.PrefetchScalarGridSpec(
                num_scalar_prefetch=0,
                grid=(grid_b,),
                in_specs=[
                    pl.BlockSpec((bt, C, HW), lambda i: (i, 0, 0)),
                    pl.BlockSpec((R, C), lambda i: (0, 0)),
                    pl.BlockSpec((R, C), lambda i: (0, 0)),
                ],
                out_specs=pl.BlockSpec((bt, C, HW), lambda i: (i, 0, 0)),
            ),
            compiler_params=pltpu.CompilerParams(
                dimension_semantics=("parallel",),
                vmem_limit_bytes=vmem_limit),
            cost_estimate=cost,
        )(x_flat, w1, w2t)
    else:
        # Two-pass fallback: per-batch slab does not fit the VMEM budget.
        if hw_tile is None:
            thw = max(128, (block_cap // (C * itemsize)) // 128 * 128)
            thw = min(thw, ((HW + 127) // 128) * 128)
        else:
            thw = hw_tile
        assert thw % 128 == 0
        n_t = pl.cdiv(HW, thw)
        ragged = (HW % thw) != 0

        cost_a = pl.CostEstimate(
            flops=2 * B * C * HW + 8 * B * C * R,
            transcendentals=B * C,
            bytes_accessed=B * C * HW * itemsize + B * C * 4 + weight_bytes)
        scale_arr = pl.pallas_call(
            _make_pool_mlp_kernel(HW, thw, ragged),
            out_shape=jax.ShapeDtypeStruct((B, C, 1), jnp.float32),
            grid_spec=pltpu.PrefetchScalarGridSpec(
                num_scalar_prefetch=0,
                grid=(B, n_t),
                in_specs=[
                    pl.BlockSpec((1, C, thw), lambda b, t: (b, 0, t)),
                    pl.BlockSpec((R, C), lambda b, t: (0, 0)),
                    pl.BlockSpec((C, R), lambda b, t: (0, 0)),
                ],
                out_specs=pl.BlockSpec((1, C, 1), lambda b, t: (b, 0, 0)),
                scratch_shapes=[pltpu.VMEM((C, 1), jnp.float32),
                                pltpu.VMEM((C, 1), jnp.float32)],
            ),
            compiler_params=pltpu.CompilerParams(
                dimension_semantics=("parallel", "arbitrary"),
                vmem_limit_bytes=vmem_limit),
            cost_estimate=cost_a,
        )(x_flat, w1, w2)

        cost_b = pl.CostEstimate(
            flops=B * C * HW,
            transcendentals=0,
            bytes_accessed=2 * B * C * HW * itemsize + B * C * 4)
        out_flat = pl.pallas_call(
            _apply_scale_kernel,
            out_shape=jax.ShapeDtypeStruct((B, C, HW), x_flat.dtype),
            grid_spec=pltpu.PrefetchScalarGridSpec(
                num_scalar_prefetch=0,
                grid=(B, n_t),
                in_specs=[
                    pl.BlockSpec((1, C, thw), lambda b, t: (b, 0, t)),
                    pl.BlockSpec((1, C, 1), lambda b, t: (b, 0, 0)),
                ],
                out_specs=pl.BlockSpec((1, C, thw), lambda b, t: (b, 0, t)),
            ),
            compiler_params=pltpu.CompilerParams(
                dimension_semantics=("parallel", "parallel"),
                vmem_limit_bytes=vmem_limit),
            cost_estimate=cost_b,
        )(x_flat, scale_arr)

    return out_flat.reshape(B, C, H, W)


# ---------------------------------------------------------------------------
# Pure-JAX reference mirroring the PyTorch forward.
# ---------------------------------------------------------------------------
def _reference(x, w1, w2):
    avg = jnp.mean(x, axis=(2, 3), keepdims=True)
    mx = jnp.max(x, axis=(2, 3), keepdims=True)

    def mlp(v):
        v = v[:, :, 0, 0]
        h = jnp.maximum(v @ w1.T, 0.0)
        return (h @ w2.T)[:, :, None, None]

    scale = jax.nn.sigmoid(mlp(avg) + mlp(mx))
    return x * scale


if __name__ == "__main__":
    key = jax.random.PRNGKey(0)
    kx, k1, k2 = jax.random.split(key, 3)

    B, C, H, W = 2, 32, 16, 16          # in_channels=32, reduction=16 -> R=2
    reduction = 16
    R = C // reduction

    x = jax.random.normal(kx, (B, C, H, W), dtype=jnp.float32)
    # 1x1 conv weights, bias=False: conv1 (R,C,1,1)->(R,C); conv2 (C,R,1,1)->(C,R)
    w1 = jax.random.normal(k1, (R, C), dtype=jnp.float32) * 0.1
    w2 = jax.random.normal(k2, (C, R), dtype=jnp.float32) * 0.1

    # 1) main single-pass path (no wrapper pad/slice)
    out = jax.block_until_ready(channel_attention_block(x, w1, w2))
    ref = _reference(x, w1, w2)
    assert out.shape == (B, C, H, W)
    assert jnp.allclose(out, ref, atol=1e-5, rtol=1e-5), "single-pass mismatch"

    # 2) two-pass fallback (large-slab path), forced at small shape (even tiles)
    out2 = jax.block_until_ready(
        channel_attention_block(x, w1, w2, force_two_pass=True, hw_tile=128))
    assert jnp.allclose(out2, ref, atol=1e-5, rtol=1e-5), "two-pass mismatch"

    # 3) non-multiple-of-128 spatial extent: full-HW block (single-pass, no pad)
    #    and ragged last HW tile with last-tile-only masking (two-pass).
    x3 = jax.random.normal(kx, (B, C, 14, 14), dtype=jnp.float32)
    ref3 = _reference(x3, w1, w2)
    out3 = jax.block_until_ready(channel_attention_block(x3, w1, w2))
    assert jnp.allclose(out3, ref3, atol=1e-5, rtol=1e-5), "196-lane single-pass mismatch"
    out3b = jax.block_until_ready(
        channel_attention_block(x3, w1, w2, force_two_pass=True, hw_tile=128))
    assert jnp.allclose(out3b, ref3, atol=1e-5, rtol=1e-5), "ragged two-pass mismatch"

    # 4) bf16 I/O: pooling sum in f32, max exact in bf16, apply done in bf16.
    xb = x.astype(jnp.bfloat16)
    outb = jax.block_until_ready(channel_attention_block(xb, w1, w2))
    refb = _reference(xb.astype(jnp.float32), w1, w2)
    assert outb.dtype == jnp.bfloat16
    assert jnp.allclose(outb.astype(jnp.float32), refb, atol=3e-2, rtol=3e-2), "bf16 mismatch"

    print("KERNEL_OK")
</pallas_src>

<mosaic_0001>
module attributes {stable_mosaic.version = 11 : i64} {
  func.func @kernel(%arg0: i32, %arg1: memref<1x32x256xf32, #tpu.memory_space<vmem>>, %arg2: memref<2x32xf32, #tpu.memory_space<vmem>>, %arg3: memref<2x32xf32, #tpu.memory_space<vmem>>, %arg4: memref<1x32x256xf32, #tpu.memory_space<vmem>>) attributes {dimension_semantics = [#tpu.dimension_semantics<parallel>], iteration_bounds = array<i64: 2>, scalar_prefetch = 0 : i64, scratch_operands = 0 : i64, tpu.core_type = #tpu.core_type<tc>, window_params = [{transform_indices = @transform_0, window_bounds = array<i64: 1, 32, 256>}, {pipeline_mode = #tpu.pipeline_mode<synchronous>, transform_indices = @transform_1, window_bounds = array<i64: 2, 32>}, {pipeline_mode = #tpu.pipeline_mode<synchronous>, transform_indices = @transform_2, window_bounds = array<i64: 2, 32>}, {transform_indices = @transform_3, window_bounds = array<i64: 1, 32, 256>}]} {
    %cst = arith.constant 0.000000e+00 : f32
    %0 = vector.broadcast %cst : f32 to vector<1x32xf32>
    %cst_0 = arith.constant -3.40282347E+38 : f32
    %1 = vector.broadcast %cst_0 : f32 to vector<1x32xf32>
    %c0 = arith.constant 0 : index
    %c0_1 = arith.constant 0 : index
    %c0_2 = arith.constant 0 : index
    %2 = vector.load %arg1[%c0, %c0_1, %c0_2] : memref<1x32x256xf32, #tpu.memory_space<vmem>>, vector<1x32x256xf32>
    %cst_3 = arith.constant dense<0.000000e+00> : vector<1x32xf32>
    %3 = vector.multi_reduction <add>, %2, %cst_3 [2] : vector<1x32x256xf32> to vector<1x32xf32>
    %4 = arith.addf %0, %3 : vector<1x32xf32>
    %cst_4 = arith.constant dense<0xFF800000> : vector<1x32xf32>
    %5 = vector.multi_reduction <maximumf>, %2, %cst_4 [2] : vector<1x32x256xf32> to vector<1x32xf32>
    %6 = arith.maximumf %1, %5 : vector<1x32xf32>
    %cst_5 = arith.constant 3.906250e-03 : f32
    %7 = vector.broadcast %cst_5 : f32 to vector<1x32xf32>
    %8 = arith.mulf %4, %7 : vector<1x32xf32>
    %9 = tpu.concatenate %8, %6 in 0 : vector<1x32xf32>, vector<1x32xf32> -> vector<2x32xf32>
    %cst_6 = arith.constant 0.000000e+00 : f32
    %10 = vector.broadcast %cst_6 : f32 to vector<2x32xf32>
    %c0_7 = arith.constant 0 : index
    %c0_8 = arith.constant 0 : index
    %11 = vector.load %arg2[%c0_7, %c0_8] : memref<2x32xf32, #tpu.memory_space<vmem>>, vector<1x32xf32>
    %12 = vector.broadcast %11 : vector<1x32xf32> to vector<2x32xf32>
    %13 = arith.mulf %9, %12 : vector<2x32xf32>
    %cst_9 = arith.constant dense<0.000000e+00> : vector<2xf32>
    %14 = vector.multi_reduction <add>, %13, %cst_9 [1] : vector<2x32xf32> to vector<2xf32>
    %15 = vector.shape_cast %14 : vector<2xf32> to vector<2x1xf32>
    %cst_10 = arith.constant 0.000000e+00 : f32
    %16 = vector.broadcast %cst_10 : f32 to vector<2x1xf32>
    %17 = arith.maximumf %15, %16 : vector<2x1xf32>
    %c0_11 = arith.constant 0 : index
    %c0_12 = arith.constant 0 : index
    %18 = vector.load %arg3[%c0_11, %c0_12] : memref<2x32xf32, #tpu.memory_space<vmem>>, vector<1x32xf32>
    %19 = vector.broadcast %17 : vector<2x1xf32> to vector<2x32xf32>
    %20 = vector.broadcast %18 : vector<1x32xf32> to vector<2x32xf32>
    %21 = arith.mulf %19, %20 : vector<2x32xf32>
    %22 = arith.addf %10, %21 : vector<2x32xf32>
    %c1 = arith.constant 1 : index
    %c0_13 = arith.constant 0 : index
    %23 = vector.load %arg2[%c1, %c0_13] : memref<2x32xf32, #tpu.memory_space<vmem>>, vector<1x32xf32>
    %24 = vector.broadcast %23 : vector<1x32xf32> to vector<2x32xf32>
    %25 = arith.mulf %9, %24 : vector<2x32xf32>
    %cst_14 = arith.constant dense<0.000000e+00> : vector<2xf32>
    %26 = vector.multi_reduction <add>, %25, %cst_14 [1] : vector<2x32xf32> to vector<2xf32>
    %27 = vector.shape_cast %26 : vector<2xf32> to vector<2x1xf32>
    %cst_15 = arith.constant 0.000000e+00 : f32
    %28 = vector.broadcast %cst_15 : f32 to vector<2x1xf32>
    %29 = arith.maximumf %27, %28 : vector<2x1xf32>
    %c1_16 = arith.constant 1 : index
    %c0_17 = arith.constant 0 : index
    %30 = vector.load %arg3[%c1_16, %c0_17] : memref<2x32xf32, #tpu.memory_space<vmem>>, vector<1x32xf32>
    %31 = vector.broadcast %29 : vector<2x1xf32> to vector<2x32xf32>
    %32 = vector.broadcast %30 : vector<1x32xf32> to vector<2x32xf32>
    %33 = arith.mulf %31, %32 : vector<2x32xf32>
    %34 = arith.addf %22, %33 : vector<2x32xf32>
    %35 = vector.extract_strided_slice %34 {offsets = [0, 0], sizes = [1, 32], strides = [1, 1]} : vector<2x32xf32> to vector<1x32xf32>
    %36 = vector.extract_strided_slice %34 {offsets = [1, 0], sizes = [1, 32], strides = [1, 1]} : vector<2x32xf32> to vector<1x32xf32>
    %37 = arith.addf %35, %36 : vector<1x32xf32>
    %38 = arith.negf %37 : vector<1x32xf32>
    %39 = math.exp %38 : vector<1x32xf32>
    %cst_18 = arith.constant 1.000000e+00 : f32
    %40 = vector.broadcast %cst_18 : f32 to vector<1x32xf32>
    %41 = arith.addf %40, %39 : vector<1x32xf32>
    %42 = arith.divf %40, %41 : vector<1x32xf32>
    %c0_19 = arith.constant 0 : index
    %c0_20 = arith.constant 0 : index
    %c0_21 = arith.constant 0 : index
    %43 = vector.load %arg1[%c0_19, %c0_20, %c0_21] : memref<1x32x256xf32, #tpu.memory_space<vmem>>, vector<1x32x256xf32>
    %44 = vector.shape_cast %42 : vector<1x32xf32> to vector<1x32x1xf32>
    %45 = vector.broadcast %44 : vector<1x32x1xf32> to vector<1x32x256xf32>
    %46 = arith.mulf %43, %45 : vector<1x32x256xf32>
    %c0_22 = arith.constant 0 : index
    %c0_23 = arith.constant 0 : index
    %c0_24 = arith.constant 0 : index
    %47 = vector.load %arg4[%c0_22, %c0_23, %c0_24] : memref<1x32x256xf32, #tpu.memory_space<vmem>>, vector<1x32x256xf32>
    tpu.vector_store %arg4[%c0_22, %c0_23, %c0_24], %46 {strides = array<i32>} : memref<1x32x256xf32, #tpu.memory_space<vmem>>, vector<1x32x256xf32>,
    return
  }
  func.func @transform_0(%arg0: i32) -> (i32, i32, i32) {
    %c0_i32 = arith.constant 0 : i32
    %c0_i32_0 = arith.constant 0 : i32
    %c0_i32_1 = arith.constant 0 : i32
    return %arg0, %c0_i32, %c0_i32_0 : i32, i32, i32
  }
  func.func @transform_1(%arg0: i32) -> (i32, i32) {
    %c0_i32 = arith.constant 0 : i32
    %c0_i32_0 = arith.constant 0 : i32
    %c0_i32_1 = arith.constant 0 : i32
    return %c0_i32, %c0_i32_0 : i32, i32
  }
  func.func @transform_2(%arg0: i32) -> (i32, i32) {
    %c0_i32 = arith.constant 0 : i32
    %c0_i32_0 = arith.constant 0 : i32
    %c0_i32_1 = arith.constant 0 : i32
    return %c0_i32, %c0_i32_0 : i32, i32
  }
  func.func @transform_3(%arg0: i32) -> (i32, i32, i32) {
    %c0_i32 = arith.constant 0 : i32
    %c0_i32_0 = arith.constant 0 : i32
    %c0_i32_1 = arith.constant 0 : i32
    return %arg0, %c0_i32, %c0_i32_0 : i32, i32, i32
  }
}

</mosaic_0001>

<llo_original>
// kernel: tpu_custom_call.1
$region0: #{tpu_custom_call.1}
  #allocation0 [shape = 'u32[]', space=smem, size = 0x4, offset = 0x4, fixed_abs, tag = 'smem constant byte address 0x4 - core index']
  #allocation1 [shape = 'u32[72,128]{1,0:T(1,128)}', space=vmem, size = 0x9000, scoped, tag = 'internal scratch']
  %s0 = inlined_call_operand.hbm [shape: f32[2,32,256], index: 0, kind: input, shape index: {}]
  %s1 = inlined_call_operand.hbm [shape: f32[2,32], index: 1, kind: input, shape index: {}]
  %s2 = inlined_call_operand.hbm [shape: f32[2,32], index: 2, kind: input, shape index: {}]
  %s3 = inlined_call_operand.hbm [shape: f32[2,32,256], index: 3, kind: output, shape index: {}]
  %s4 = sld [smem:[#allocation0]]
  $region57: #{tpu_custom_call.1} parent=0
    _
  %s6 = ssub.s32 1, %s4
  %s7 = scalar_select 0, %s6, %s4
  $region1: #{tpu_custom_call.1} parent=0
    #allocation2 [shape = 'u8[65536]{0}', space=vmem, size = 0x10000, scoped, tag = 'input window, operand 0']
    #allocation3 [shape = 's32[2]{0}', space=sflag, size = 0x8, scoped, tag = 'scoped memory for tpu_custom_call.1']
    #allocation4 [shape = 's32[2]{0}', space=sflag, size = 0x8, scoped, tag = 'scoped memory for tpu_custom_call.1']
    #allocation5 [shape = 'u8[1024]{0}', space=vmem, size = 0x400, scoped, tag = 'input window, operand 1, single buffered']
    #allocation6 [shape = 's32[1]{0}', space=sflag, size = 0x4, scoped, tag = 'scoped memory for tpu_custom_call.1']
    #allocation7 [shape = 'u8[1024]{0}', space=vmem, size = 0x400, scoped, tag = 'input window, operand 2, single buffered']
    #allocation8 [shape = 'u8[65536]{0}', space=vmem, size = 0x10000, scoped, tag = 'output window, operand 0']
    %8 = vsyncpa [#allocation3], 0
    %s9 = scalar_lea.sflag [#allocation3], 1
    %10 = vsyncpa %s9, 0
    %11 = vsyncpa [#allocation6], 0
    %12 = vsyncpa [#allocation4], 0
    %s13 = scalar_lea.sflag [#allocation4], 1
    %14 = vsyncpa %s13, 0
    loop: start=0, step=1, limit=4
    $region2: #{tpu_custom_call.1} parent=1 // loop_pre_header
      _
    $region3: #{tpu_custom_call.1} parent=1 // loop_header
      %s16 = sphi 0, %s20
      %p17 = scmp.ge.s32.totalorder %s16, 4
      %s26 = sphi 0, %s28
      %s29 = sphi 0, %s26
      %s30 = sphi 0, %s29
      %s46 = sphi 0, %s30
      %s50 = sphi 0, %s50
      %s52 = sphi 0, %s50
      %s53 = sphi 0, %s52
      %s67 = sphi 0, %s53
      %s71 = sphi 0, %s71
      %s73 = sphi 0, %s71
      %s74 = sphi 0, %s73
      %s88 = sphi 0, %s74
      %s94 = sphi 0, %s96
      %s97 = sphi 0, %s94
      %s98 = sphi 0, %s97
      %s114 = sphi 0, %s98
    $region4: #{tpu_custom_call.1} parent=1 // loop_header_branch
      %19 = sbr.rel (%p17) target = $region8
    $region5: #{tpu_custom_call.1} parent=1 // loop_body
      %s21 = ssub.s32 %s16, 1
      %s22 = ssub.s32 %s16, 2
      %s23 = sadd.s32 %s16, 1
      %s24 = ssub.s32 %s16, %s23
      %p25 = scmp.eq.s32.totalorder %s24, 0
      %s27 = sadd.s32 %s26, 1
      %s28 = scalar_select %p25, %s26, %s27
      %p31 = pneg %p25
      %p32 = scmp.eq.s32.totalorder %s16, 1
      %p33 = por %p31, %p32
      %p34 = scmp.ne.s32.totalorder %s26, %s29
      %p35 = scmp.eq.s32.totalorder %s16, 0
      %p36 = por %p34, %p35
      %p37 = scmp.ne.s32.totalorder %s26, %s29
      %p38 = scmp.eq.s32.totalorder %s21, 1
      %p39 = por %p37, %p38
      %p40 = scmp.ne.s32.totalorder %s29, %s30
      %p41 = scmp.eq.s32.totalorder %s21, 0
      %p42 = por %p40, %p41
      %p43 = scmp.ne.s32.totalorder %s29, %s30
      %p44 = scmp.eq.s32.totalorder %s22, 1
      %p45 = por %p43, %p44
      %p47 = scmp.ne.s32.totalorder %s30, %s46
      %p48 = scmp.eq.s32.totalorder %s22, 0
      %p49 = por %p47, %p48
      %s51 = sadd.s32 %s50, 1
      %p54 = scmp.eq.s32.totalorder %s16, 1
      %p55 = scmp.ne.s32.totalorder %s50, %s52
      %p56 = scmp.eq.s32.totalorder %s16, 0
      %p57 = por %p55, %p56
      %p58 = scmp.ne.s32.totalorder %s50, %s52
      %p59 = scmp.eq.s32.totalorder %s21, 1
      %p60 = por %p58, %p59
      %p61 = scmp.ne.s32.totalorder %s52, %s53
      %p62 = scmp.eq.s32.totalorder %s21, 0
      %p63 = por %p61, %p62
      %p64 = scmp.ne.s32.totalorder %s52, %s53
      %p65 = scmp.eq.s32.totalorder %s22, 1
      %p66 = por %p64, %p65
      %p68 = scmp.ne.s32.totalorder %s53, %s67
      %p69 = scmp.eq.s32.totalorder %s22, 0
      %p70 = por %p68, %p69
      %s72 = sadd.s32 %s71, 1
      %p75 = scmp.eq.s32.totalorder %s16, 1
      %p76 = scmp.ne.s32.totalorder %s71, %s73
      %p77 = scmp.eq.s32.totalorder %s16, 0
      %p78 = por %p76, %p77
      %p79 = scmp.ne.s32.totalorder %s71, %s73
      %p80 = scmp.eq.s32.totalorder %s21, 1
      %p81 = por %p79, %p80
      %p82 = scmp.ne.s32.totalorder %s73, %s74
      %p83 = scmp.eq.s32.totalorder %s21, 0
      %p84 = por %p82, %p83
      %p85 = scmp.ne.s32.totalorder %s73, %s74
      %p86 = scmp.eq.s32.totalorder %s22, 1
      %p87 = por %p85, %p86
      %p89 = scmp.ne.s32.totalorder %s74, %s88
      %p90 = scmp.eq.s32.totalorder %s22, 0
      %p91 = por %p89, %p90
      %s92 = ssub.s32 %s16, %s23
      %p93 = scmp.eq.s32.totalorder %s92, 0
      %s95 = sadd.s32 %s94, 1
      %s96 = scalar_select %p93, %s94, %s95
      %p99 = pneg %p93
      %p100 = scmp.eq.s32.totalorder %s16, 1
      %p101 = por %p99, %p100
      %p102 = scmp.ne.s32.totalorder %s94, %s97
      %p103 = scmp.eq.s32.totalorder %s16, 0
      %p104 = por %p102, %p103
      %p105 = scmp.ne.s32.totalorder %s94, %s97
      %p106 = scmp.eq.s32.totalorder %s21, 1
      %p107 = por %p105, %p106
      %p108 = scmp.ne.s32.totalorder %s97, %s98
      %p109 = scmp.eq.s32.totalorder %s21, 0
      %p110 = por %p108, %p109
      %p111 = scmp.ne.s32.totalorder %s97, %s98
      %p112 = scmp.eq.s32.totalorder %s22, 1
      %p113 = por %p111, %p112
      %p115 = scmp.ne.s32.totalorder %s98, %s114
      %p116 = scmp.eq.s32.totalorder %s22, 0
      %p117 = por %p115, %p116
      %p118 = scmp.le.s32.totalorder 1, %s16
      %p119 = scmp.lt.s32.totalorder %s16, 3
      %p120 = pnand %p118, %p119
      %p121 = pneg %p120
      // Predicated region
      $region9: #{tpu_custom_call.1} parent=5 // pred_check
        _
      $region10: #{tpu_custom_call.1} parent=5 // pred_check_branch
        %123 = sbr.rel (%p120) target = $region12
      $region11: #{tpu_custom_call.1} parent=5 // pred_region
        %s124 = ssub.s32 %s16, 1
        // Predicated region
        $region13: #{tpu_custom_call.1} parent=11 // pred_check
          %p125 = pneg %p63
        $region14: #{tpu_custom_call.1} parent=11 // pred_check_branch
          %127 = sbr.rel (%p125) target = $region16
        $region15: #{tpu_custom_call.1} parent=11 // pred_region
          %129 = vsyncadd [#allocation6], 0
          %s131 = sshll.u32 %s1, 4
          %s132 = int_to_ptr.hbm [resolvable:$true] %s131
          %s133 = sshll.u32 [#allocation5], 4
          %s134 = int_to_ptr.vmem [resolvable:$true] %s133
          %136 = dma.hbm_to_vmem [thread:$0]  %s132, 32, %s134, [#allocation6]
        $region16: #{tpu_custom_call.1} parent=11 // pred_fallthru
          _
        // Predicated region
        $region17: #{tpu_custom_call.1} parent=11 // pred_check
          %p137 = pneg %p84
        $region18: #{tpu_custom_call.1} parent=11 // pred_check_branch
          %139 = sbr.rel (%p137) target = $region20
        $region19: #{tpu_custom_call.1} parent=11 // pred_region
          %141 = vsyncadd [#allocation6], 0
          %s143 = sshll.u32 %s2, 4
          %s144 = int_to_ptr.hbm [resolvable:$true] %s143
          %s145 = sshll.u32 [#allocation7], 4
          %s146 = int_to_ptr.vmem [resolvable:$true] %s145
          %148 = dma.hbm_to_vmem [thread:$0]  %s144, 32, %s146, [#allocation6]
        $region20: #{tpu_custom_call.1} parent=11 // pred_fallthru
          _
      $region12: #{tpu_custom_call.1} parent=5 // pred_fallthru
        _
      %p149 = scmp.lt.s32.totalorder %s16, 2
      // Predicated region
      $region21: #{tpu_custom_call.1} parent=5 // pred_check
        %p150 = pneg %p149
      $region22: #{tpu_custom_call.1} parent=5 // pred_check_branch
        %152 = sbr.rel (%p150) target = $region24
      $region23: #{tpu_custom_call.1} parent=5 // pred_region
        // Predicated region
        $region25: #{tpu_custom_call.1} parent=23 // pred_check
          %p153 = pneg %p36
        $region26: #{tpu_custom_call.1} parent=23 // pred_check_branch
          %155 = sbr.rel (%p153) target = $region28
        $region27: #{tpu_custom_call.1} parent=23 // pred_region
          %s156 = sand.u32 %s26, 1
          %s157 = scalar_lea.sflag [#allocation3], %s156
          %s158 = sand.u32 %s26, 1
          %s159 = smul.addr %s158, 64
          %s160 = scalar_lea.vmem [#allocation2], %s159
          %162 = vsyncadd %s157, 0
          %s163 = smul.addr %s16, 8
          %s164 = smul.addr %s163, 8
          %s165 = scalar_lea.hbm %s0, %s164
          %s166 = sshll.u32 %s165, 4
          %s167 = int_to_ptr.hbm [resolvable:$true] %s166
          %s168 = sshll.u32 %s160, 4
          %s169 = int_to_ptr.vmem [resolvable:$true] %s168
          %174 = dma.hbm_to_vmem [thread:$0]  %s167, 1024, %s169, %s157, 256, 256, 16
        $region28: #{tpu_custom_call.1} parent=23 // pred_fallthru
          _
      $region24: #{tpu_custom_call.1} parent=5 // pred_fallthru
        _
      %p175 = scmp.le.s32.totalorder 1, %s16
      %p176 = scmp.lt.s32.totalorder %s16, 3
      %p177 = pnand %p175, %p176
      %p178 = pneg %p177
      // Predicated region
      $region29: #{tpu_custom_call.1} parent=5 // pred_check
        _
      $region30: #{tpu_custom_call.1} parent=5 // pred_check_branch
        %180 = sbr.rel (%p177) target = $region32
      $region31: #{tpu_custom_call.1} parent=5 // pred_region
        %s181 = ssub.s32 %s16, 1
        %s182 = sand.u32 %s29, 1
        %s183 = scalar_lea.sflag [#allocation3], %s182
        %s184 = sand.u32 %s29, 1
        %s185 = smul.addr %s184, 64
        %s186 = scalar_lea.vmem [#allocation2], %s185
        // Predicated region
        $region33: #{tpu_custom_call.1} parent=31 // pred_check
          %p187 = pneg %p42
        $region34: #{tpu_custom_call.1} parent=31 // pred_check_branch
          %189 = sbr.rel (%p187) target = $region36
        $region35: #{tpu_custom_call.1} parent=31 // pred_region
          %191 = dma.done %s183, 1024
        $region36: #{tpu_custom_call.1} parent=31 // pred_fallthru
          _
        // Predicated region
        $region37: #{tpu_custom_call.1} parent=31 // pred_check
          %p192 = pneg %p63
        $region38: #{tpu_custom_call.1} parent=31 // pred_check_branch
          %194 = sbr.rel (%p192) target = $region40
        $region39: #{tpu_custom_call.1} parent=31 // pred_region
          %196 = dma.done [#allocation6], 32
        $region40: #{tpu_custom_call.1} parent=31 // pred_fallthru
          _
        // Predicated region
        $region41: #{tpu_custom_call.1} parent=31 // pred_check
          %p197 = pneg %p84
        $region42: #{tpu_custom_call.1} parent=31 // pred_check_branch
          %199 = sbr.rel (%p197) target = $region44
        $region43: #{tpu_custom_call.1} parent=31 // pred_region
          %201 = dma.done [#allocation6], 32
        $region44: #{tpu_custom_call.1} parent=31 // pred_fallthru
          _
        %s202 = sand.u32 %s29, 1
        %s203 = scalar_lea.sflag [#allocation3], %s202
        %s204 = sand.u32 %s29, 1
        %s205 = smul.addr %s204, 64
        %s206 = scalar_lea.vmem [#allocation2], %s205
        %p207 = pneg %p42
        %p208 = pneg %p39
        %p209 = pneg %p63
        %p210 = pneg %p60
        %p211 = pneg %p84
        %p212 = pneg %p81
        %p213 = pneg %p110
        %p214 = pneg %p107
        %s215 = sand.u32 %s97, 1
        %s216 = scalar_lea.sflag [#allocation4], %s215
        %s217 = sand.u32 %s97, 1
        %s218 = smul.addr %s217, 64
        %s219 = scalar_lea.vmem [#allocation8], %s218
        %v220 = vld [vmem:[%s186] sm:$0xff]
        %v221 = vld [vmem:[%s186 + $0x8] sm:$0xff]
        %v222 = vld [vmem:[%s186 + $0x10] sm:$0xff]
        %v223 = vld [vmem:[%s186 + $0x18] sm:$0xff]
        %v224 = vld [vmem:[%s186 + $0x20] sm:$0xff]
        %v225 = vld [vmem:[%s186 + $0x28] sm:$0xff]
        %v226 = vld [vmem:[%s186 + $0x30] sm:$0xff]
        %v227 = vld [vmem:[%s186 + $0x38] sm:$0xff]
        %v228 = vadd.f32 %v220, %v221
        %229 = vadd.xlane.f32.xlu0 %v228
        %v230 = vpop.xlane.xlu0 %229
        %v231 = vadd.f32 %v222, %v223
        %232 = vadd.xlane.f32.xlu0 %v231
        %v233 = vpop.xlane.xlu0 %232
        %v234 = vadd.f32 %v224, %v225
        %235 = vadd.xlane.f32.xlu0 %v234
        %v236 = vpop.xlane.xlu0 %235
        %v237 = vadd.f32 %v226, %v227
        %238 = vadd.xlane.f32.xlu0 %v237
        %v239 = vpop.xlane.xlu0 %238
        %v240 = vadd.f32 %v230, 0.0
        %v241 = vadd.f32 %v233, 0.0
        %v242 = vadd.f32 %v236, 0.0
        %v243 = vadd.f32 %v239, 0.0
        %v244 = vmax.f32 %v220, %v221
        %245 = vmax.xlane.f32.xlu0 %v244
        %v246 = vpop.xlane.xlu0 %245
        %v247 = vmax.f32 %v222, %v223
        %248 = vmax.xlane.f32.xlu0 %v247
        %v249 = vpop.xlane.xlu0 %248
        %v250 = vmax.f32 %v224, %v225
        %251 = vmax.xlane.f32.xlu0 %v250
        %v252 = vpop.xlane.xlu0 %251
        %v253 = vmax.f32 %v226, %v227
        %254 = vmax.xlane.f32.xlu0 %v253
        %v255 = vpop.xlane.xlu0 %254
        %v256 = vmax.f32 %v246, -3.4028235e+38
        %v257 = vmax.f32 %v249, -3.4028235e+38
        %v258 = vmax.f32 %v252, -3.4028235e+38
        %v259 = vmax.f32 %v255, -3.4028235e+38
        %v260 = vmul.f32 %v240, 0.00390625
        %v261 = vmul.f32 %v241, 0.00390625
        %v262 = vmul.f32 %v242, 0.00390625
        %v263 = vmul.f32 %v243, 0.00390625
        %v268 = vlaneseq
        %v269 = vand.u32 %v268, 127
        %v270 = vperm.slane %v260, %v269
        %v271 = vadd.s32 %v269, 4294967288
        %v272 = vperm.slane %v261, %v271
        %vm273 = vcmask 130112
        %v274 = vsel %vm273, %v272, %v270
        %v275 = vadd.s32 %v269, 4294967280
        %v276 = vperm.slane %v262, %v275
        %vm277 = vcmask 195712
        %v278 = vsel %vm277, %v276, %v274
        %v279 = vadd.s32 %v269, 4294967272
        %v280 = vperm.slane %v263, %v279
        %vm281 = vcmask 261312
        %v282 = vsel %vm281, %v280, %v278
        %v288 = vperm.slane %v256, %v269
        %v289 = vperm.slane %v257, %v271
        %v290 = vsel %vm273, %v289, %v288
        %v291 = vperm.slane %v258, %v275
        %v292 = vsel %vm277, %v291, %v290
        %v293 = vperm.slane %v259, %v279
        %v294 = vsel %vm281, %v293, %v292
        %vm296 = vcmask 1040384
        %v297 = vsel %vm296, %v282, %v294
        %v298 = vld [vmem:[#allocation5] sm:$0x1]
        %v299 = vperm.slane %v298, 0
        %v300 = vmul.f32 %v297, %v299
        %vm301 = vcmask 254976
        %v302 = vsel %vm301, %v300, 0.0
        %303 = vadd.xlane.f32.xlu0 %v302
        %v304 = vpop.xlane.xlu0 %303
        %v305 = vmax.f32 %v304, 0.0
        %v306 = vld [vmem:[#allocation7] sm:$0x1]
        %v307 = vperm.slane %v306, 0
        %v308 = vmul.f32 %v305, %v307
        %v309 = vadd.f32 %v308, 0.0
        %v310 = vld [vmem:[#allocation5 + $0x1] sm:$0x1]
        %v311 = vperm.slane %v310, 0
        %v312 = vmul.f32 %v297, %v311
        %v313 = vsel %vm301, %v312, 0.0
        %314 = vadd.xlane.f32.xlu0 %v313
        %v315 = vpop.xlane.xlu0 %314
        %v316 = vmax.f32 %v315, 0.0
        %v317 = vld [vmem:[#allocation7 + $0x1] sm:$0x1]
        %v318 = vperm.slane %v317, 0
        %v319 = vmul.f32 %v316, %v318
        %v320 = vadd.f32 %v309, %v319
        %v322 = vrot.slane %v320, 1
        %v324 = vadd.f32 %v320, %v322
        %v325 = vxor.u32 %v324, 2147483648
        %v326 = vmul.f32 %v325, 1.442695
        %v327 = vpow.pop %v326
        %v328 = vadd.f32 %v327, 1.0
        %v329 = vrcp.pop %v328
        %v330 = vmul.f32 %v328, %v329
        %v331 = vsub.f32 1.0, %v330
        %v332 = vmul.f32 %v329, %v331
        %v333 = vadd.f32 %v329, %v332
        %vm334 = vweird.f32 %v328
        %vm335 = vweird.f32 %v329
        %vm336 = vmor %vm334, %vm335
        %v337 = vsel %vm336, %v329, %v333
        %v338 = vand.u32 2147483647, %v328
        %vm339 = vcmp.eq.f32.partialorder %v338, 8.507059e+37
        %v340 = vand.u32 %v328, 2147483648
        %v341 = vor.u32 1.1754944e-38, %v340
        %v342 = vsel %vm339, %v341, %v337
        %v343 = vmul.f32 1.0, %v342
        %v344 = vperm.slane %v343, 0
        %v345 = vlaneseq
        %v346 = vshrl.u32 %v345, 7
        %348 = vset.pattern.permute.xlu0 %v346
        %349 = vperm.xlu0 %348, %v344
        %v350 = vpop.permute.xlu0 %349
        %v351 = vlaneseq
        %v352 = vshrl.u32 %v351, 7
        %v353 = vadd.s32 %v352, 8
        %354 = vset.pattern.permute.xlu0 %v353
        %355 = vperm.xlu0 %354, %v344
        %v356 = vpop.permute.xlu0 %355
        %v357 = vlaneseq
        %v358 = vshrl.u32 %v357, 7
        %v359 = vadd.s32 %v358, 16
        %360 = vset.pattern.permute.xlu0 %v359
        %361 = vperm.xlu0 %360, %v344
        %v362 = vpop.permute.xlu0 %361
        %v363 = vlaneseq
        %v364 = vshrl.u32 %v363, 7
        %v365 = vadd.s32 %v364, 24
        %366 = vset.pattern.permute.xlu0 %v365
        %367 = vperm.xlu0 %366, %v344
        %v368 = vpop.permute.xlu0 %367
        %v369 = vmul.f32 %v220, %v350
        %v370 = vmul.f32 %v221, %v350
        %v371 = vmul.f32 %v222, %v356
        %v372 = vmul.f32 %v223, %v356
        %v373 = vmul.f32 %v224, %v362
        %v374 = vmul.f32 %v225, %v362
        %v375 = vmul.f32 %v226, %v368
        %v376 = vmul.f32 %v227, %v368
        %377 = vst [vmem:[%s219] sm:$0xff] %v369
        %378 = vst [vmem:[%s219 + $0x8] sm:$0xff] %v370
        %379 = vst [vmem:[%s219 + $0x10] sm:$0xff] %v371
        %380 = vst [vmem:[%s219 + $0x18] sm:$0xff] %v372
        %381 = vst [vmem:[%s219 + $0x20] sm:$0xff] %v373
        %382 = vst [vmem:[%s219 + $0x28] sm:$0xff] %v374
        %383 = vst [vmem:[%s219 + $0x30] sm:$0xff] %v375
        %384 = vst [vmem:[%s219 + $0x38] sm:$0xff] %v376
        %s385 = sand.u32 %s97, 1
        %s386 = scalar_lea.sflag [#allocation4], %s385
        %s387 = sand.u32 %s97, 1
        %s388 = smul.addr %s387, 64
        %s389 = scalar_lea.vmem [#allocation8], %s388
        // Predicated region
        $region45: #{tpu_custom_call.1} parent=31 // pred_check
          %p390 = pneg %p107
        $region46: #{tpu_custom_call.1} parent=31 // pred_check_branch
          %392 = sbr.rel (%p390) target = $region48
        $region47: #{tpu_custom_call.1} parent=31 // pred_region
          %394 = vsyncadd %s386, 0
          %s395 = smul.addr %s21, 8
          %s396 = smul.addr %s395, 8
          %s397 = scalar_lea.hbm %s3, %s396
          %s398 = sshll.u32 %s389, 4
          %s399 = int_to_ptr.vmem [resolvable:$true] %s398
          %s400 = sshll.u32 %s397, 4
          %s401 = int_to_ptr.hbm [resolvable:$true] %s400
          %406 = dma.vmem_to_hbm [thread:$0]  %s399, 1024, %s401, %s386, 256, 256, 16
        $region48: #{tpu_custom_call.1} parent=31 // pred_fallthru
          _
      $region32: #{tpu_custom_call.1} parent=5 // pred_fallthru
        _
      %p407 = scmp.le.s32.totalorder 2, %s16
      // Predicated region
      $region49: #{tpu_custom_call.1} parent=5 // pred_check
        %p408 = pneg %p407
      $region50: #{tpu_custom_call.1} parent=5 // pred_check_branch
        %410 = sbr.rel (%p408) target = $region52
      $region51: #{tpu_custom_call.1} parent=5 // pred_region
        %s411 = ssub.s32 %s16, 2
        // Predicated region
        $region53: #{tpu_custom_call.1} parent=51 // pred_check
          %p412 = pneg %p113
        $region54: #{tpu_custom_call.1} parent=51 // pred_check_branch
          %414 = sbr.rel (%p412) target = $region56
        $region55: #{tpu_custom_call.1} parent=51 // pred_region
          %s415 = sand.u32 %s98, 1
          %s416 = scalar_lea.sflag [#allocation4], %s415
          %s417 = sand.u32 %s98, 1
          %s418 = smul.addr %s417, 64
          %s419 = scalar_lea.vmem [#allocation8], %s418
          %421 = dma.done %s416, 1024
        $region56: #{tpu_custom_call.1} parent=51 // pred_fallthru
          _
      $region52: #{tpu_custom_call.1} parent=5 // pred_fallthru
        _
    $region6: #{tpu_custom_call.1} parent=1 // loop_footer
      %s20 = sadd.s32 1, %s16
    $region7: #{tpu_custom_call.1} parent=1 // loop_footer_branch
      %15 = sbr.rel target = $region3
    $region8: #{tpu_custom_call.1} parent=1 // loop_exit
      _
    %422 = vsyncpa [#allocation3], 1
    %s423 = scalar_lea.sflag [#allocation3], 1
    %424 = vsyncpa %s423, 1
    %425 = vsyncpa [#allocation6], 1
    %426 = vsyncpa [#allocation4], 1
    %s427 = scalar_lea.sflag [#allocation4], 1
    %428 = vsyncpa %s427, 1

</llo_original>
